<compile_context>
chip_gen: v7x
topology: tpu7x:2x2x1
jax: 0.10.0
libtpu: 0.0.40
codegen_flags: <defaults>
</compile_context>

<pallas_src>
import jax
import jax.numpy as jnp
from jax.experimental import pallas as pl
from jax.experimental.pallas import tpu as pltpu


def _scale_mul_kernel(s_ref, x_ref, o_ref):
    # s_ref: (1, R_blk)   lane-dense per-(batch*channel) scale for this block
    # x_ref: (R_blk, HW)  feature rows (channels on sublanes, spatial on lanes)
    # o_ref: (R_blk, HW)
    s_col = jnp.transpose(s_ref[...])   # (R_blk, 1): one-time lane->sublane relayout (XLU)
    o_ref[...] = x_ref[...] * s_col     # VPU broadcast multiply across lanes


def _broadcast_mul_impl(scale, x):
    """scale: (N, C, 1, 1), x: (N, C, H, W) -> scale * x, shape (N, C, H, W)."""
    n, c, h, w = x.shape
    assert scale.shape == (n, c, 1, 1)

    rows, hw = n * c, h * w

    # 2 row blocks: both v7x TensorCores + input/output DMA overlap on v5e/v6e.
    # Require each block's sublane count to be a multiple of 8; else 1 block.
    num_blocks = 2 if (rows % 16 == 0 and rows >= 16) else 1
    rpb = rows // num_blocks

    x_flat = x.reshape(rows, hw)                    # free row-major view
    s_blk = scale.reshape(num_blocks, 1, rpb)       # free view; lane-dense per block

    itemsize = jnp.dtype(x.dtype).itemsize
    out_flat = pl.pallas_call(
        _scale_mul_kernel,
        out_shape=jax.ShapeDtypeStruct((rows, hw), x.dtype),
        grid=(num_blocks,),
        in_specs=[
            # scale: leading (block) dim squeezed out -> kernel sees (1, rpb)
            pl.BlockSpec((None, 1, rpb), lambda i: (i, 0, 0)),
            # x: one contiguous row block per grid step
            pl.BlockSpec((rpb, hw), lambda i: (i, 0)),
        ],
        out_specs=pl.BlockSpec((rpb, hw), lambda i: (i, 0)),
        # Output reuses x_flat's buffer (input index 1 -> output index 0).
        input_output_aliases={1: 0},
        cost_estimate=pl.CostEstimate(
            flops=rows * hw,
            transcendentals=0,
            bytes_accessed=2 * rows * hw * itemsize + rows * itemsize,
        ),
        compiler_params=pltpu.CompilerParams(
            dimension_semantics=("parallel",),
        ),
    )(s_blk, x_flat)

    return out_flat.reshape(n, c, h, w)


# Donate x (arg 1) so the aliased output can truly reuse its HBM buffer.
broadcast_mul = jax.jit(_broadcast_mul_impl, donate_argnums=(1,))


if __name__ == "__main__":
    key = jax.random.PRNGKey(0)
    k1, k2 = jax.random.split(key)
    # Shapes taken directly from the module's forward (already small: ~1.35 MB traffic).
    x360 = jax.random.normal(k1, (1, 864, 14, 14), dtype=jnp.float32)
    x365 = jax.random.normal(k2, (1, 864, 1, 1), dtype=jnp.float32)

    # Compute the plain-JAX reference BEFORE the kernel call: x360 is donated.
    ref = x365 * x360
    ref = jax.block_until_ready(ref)

    out = broadcast_mul(x365, x360)
    out = jax.block_until_ready(out)

    assert out.shape == (1, 864, 14, 14)
    assert jnp.allclose(out, ref, atol=1e-6, rtol=1e-6)
    print("KERNEL_OK")
</pallas_src>

<mosaic_0001>
module attributes {stable_mosaic.version = 11 : i64} {
  func.func @_scale_mul_kernel(%arg0: i32, %arg1: memref<1x1x432xf32, #tpu.memory_space<vmem>>, %arg2: memref<432x196xf32, #tpu.memory_space<vmem>>, %arg3: memref<432x196xf32, #tpu.memory_space<vmem>>) attributes {dimension_semantics = [#tpu.dimension_semantics<parallel>], iteration_bounds = array<i64: 2>, scalar_prefetch = 0 : i64, scratch_operands = 0 : i64, tpu.core_type = #tpu.core_type<tc>, window_params = [{transform_indices = @transform_0, window_bounds = array<i64: 1, 1, 432>}, {transform_indices = @transform_1, window_bounds = array<i64: 432, 196>}, {transform_indices = @transform_2, window_bounds = array<i64: 432, 196>}]} {
    %c0 = arith.constant 0 : index
    %c0_0 = arith.constant 0 : index
    %c0_1 = arith.constant 0 : index
    %0 = vector.load %arg1[%c0, %c0_0, %c0_1] : memref<1x1x432xf32, #tpu.memory_space<vmem>>, vector<1x1x432xf32>
    %1 = vector.shape_cast %0 : vector<1x1x432xf32> to vector<1x432xf32>
    %2 = tpu.transpose %1, [1, 0] : vector<1x432xf32> -> vector<432x1xf32>
    %c0_2 = arith.constant 0 : index
    %c0_3 = arith.constant 0 : index
    %3 = vector.load %arg2[%c0_2, %c0_3] : memref<432x196xf32, #tpu.memory_space<vmem>>, vector<432x196xf32>
    %4 = vector.broadcast %2 : vector<432x1xf32> to vector<432x196xf32>
    %5 = arith.mulf %3, %4 : vector<432x196xf32>
    %c0_4 = arith.constant 0 : index
    %c0_5 = arith.constant 0 : index
    %6 = vector.load %arg3[%c0_4, %c0_5] : memref<432x196xf32, #tpu.memory_space<vmem>>, vector<432x196xf32>
    tpu.vector_store %arg3[%c0_4, %c0_5], %5 {strides = array<i32>} : memref<432x196xf32, #tpu.memory_space<vmem>>, vector<432x196xf32>,
    return
  }
  func.func @transform_0(%arg0: i32) -> (i32, i32, i32) {
    %c0_i32 = arith.constant 0 : i32
    %c0_i32_0 = arith.constant 0 : i32
    %c0_i32_1 = arith.constant 0 : i32
    return %arg0, %c0_i32, %c0_i32_0 : i32, i32, i32
  }
  func.func @transform_1(%arg0: i32) -> (i32, i32) {
    %c0_i32 = arith.constant 0 : i32
    %c0_i32_0 = arith.constant 0 : i32
    return %arg0, %c0_i32 : i32, i32
  }
  func.func @transform_2(%arg0: i32) -> (i32, i32) {
    %c0_i32 = arith.constant 0 : i32
    %c0_i32_0 = arith.constant 0 : i32
    return %arg0, %c0_i32 : i32, i32
  }
}

</mosaic_0001>

<llo_original>
// kernel: _broadcast_mul_impl.1
$region0: #{_broadcast_mul_impl.1}
  #allocation0 [shape = 'u32[]', space=smem, size = 0x4, offset = 0x4, fixed_abs, tag = 'smem constant byte address 0x4 - core index']
  #allocation1 [shape = 'u32[144,128]{1,0:T(1,128)}', space=vmem, size = 0x12000, scoped, tag = 'internal scratch']
  %s0 = inlined_call_operand.vmem [shape: f32[2,1,432], index: 0, kind: input, shape index: {}]
  %s1 = inlined_call_operand.vmem [shape: f32[864,196], index: 1, kind: input, shape index: {}, may-alias: {1,2}]
  %s2 = inlined_call_operand.vmem [shape: f32[864,196], index: 2, kind: output, shape index: {}, may-alias: {1,2}]
  %s3 = sld [smem:[#allocation0]]
  $region41: #{_broadcast_mul_impl.1} parent=0
    _
  %s5 = ssub.s32 1, %s3
  %s6 = scalar_select 0, %s5, %s3
  loop: start=0, step=1, limit=4
  $region2: #{_broadcast_mul_impl.1} parent=0 // loop_pre_header
    _
  $region3: #{_broadcast_mul_impl.1} parent=0 // loop_header
    %s8 = sphi 0, %s12
    %p9 = scmp.ge.s32.totalorder %s8, 4
    %s18 = sphi 0, %s20
    %s21 = sphi 0, %s18
    %s22 = sphi 0, %s21
    %s38 = sphi 0, %s22
    %s44 = sphi 0, %s46
    %s47 = sphi 0, %s44
    %s48 = sphi 0, %s47
    %s64 = sphi 0, %s48
    %s70 = sphi 0, %s72
    %s73 = sphi 0, %s70
    %s74 = sphi 0, %s73
    %s90 = sphi 0, %s74
  $region4: #{_broadcast_mul_impl.1} parent=0 // loop_header_branch
    %11 = sbr.rel (%p9) target = $region8
  $region5: #{_broadcast_mul_impl.1} parent=0 // loop_body
    %s13 = ssub.s32 %s8, 1
    %s14 = ssub.s32 %s8, 2
    %s15 = sadd.s32 %s8, 1
    %s16 = ssub.s32 %s8, %s15
    %p17 = scmp.eq.s32.totalorder %s16, 0
    %s19 = sadd.s32 %s18, 1
    %s20 = scalar_select %p17, %s18, %s19
    %p23 = pneg %p17
    %p24 = scmp.eq.s32.totalorder %s8, 1
    %p25 = por %p23, %p24
    %p26 = scmp.ne.s32.totalorder %s18, %s21
    %p27 = scmp.eq.s32.totalorder %s8, 0
    %p28 = por %p26, %p27
    %p29 = scmp.ne.s32.totalorder %s18, %s21
    %p30 = scmp.eq.s32.totalorder %s13, 1
    %p31 = por %p29, %p30
    %p32 = scmp.ne.s32.totalorder %s21, %s22
    %p33 = scmp.eq.s32.totalorder %s13, 0
    %p34 = por %p32, %p33
    %p35 = scmp.ne.s32.totalorder %s21, %s22
    %p36 = scmp.eq.s32.totalorder %s14, 1
    %p37 = por %p35, %p36
    %p39 = scmp.ne.s32.totalorder %s22, %s38
    %p40 = scmp.eq.s32.totalorder %s14, 0
    %p41 = por %p39, %p40
    %s42 = ssub.s32 %s8, %s15
    %p43 = scmp.eq.s32.totalorder %s42, 0
    %s45 = sadd.s32 %s44, 1
    %s46 = scalar_select %p43, %s44, %s45
    %p49 = pneg %p43
    %p50 = scmp.eq.s32.totalorder %s8, 1
    %p51 = por %p49, %p50
    %p52 = scmp.ne.s32.totalorder %s44, %s47
    %p53 = scmp.eq.s32.totalorder %s8, 0
    %p54 = por %p52, %p53
    %p55 = scmp.ne.s32.totalorder %s44, %s47
    %p56 = scmp.eq.s32.totalorder %s13, 1
    %p57 = por %p55, %p56
    %p58 = scmp.ne.s32.totalorder %s47, %s48
    %p59 = scmp.eq.s32.totalorder %s13, 0
    %p60 = por %p58, %p59
    %p61 = scmp.ne.s32.totalorder %s47, %s48
    %p62 = scmp.eq.s32.totalorder %s14, 1
    %p63 = por %p61, %p62
    %p65 = scmp.ne.s32.totalorder %s48, %s64
    %p66 = scmp.eq.s32.totalorder %s14, 0
    %p67 = por %p65, %p66
    %s68 = ssub.s32 %s8, %s15
    %p69 = scmp.eq.s32.totalorder %s68, 0
    %s71 = sadd.s32 %s70, 1
    %s72 = scalar_select %p69, %s70, %s71
    %p75 = pneg %p69
    %p76 = scmp.eq.s32.totalorder %s8, 1
    %p77 = por %p75, %p76
    %p78 = scmp.ne.s32.totalorder %s70, %s73
    %p79 = scmp.eq.s32.totalorder %s8, 0
    %p80 = por %p78, %p79
    %p81 = scmp.ne.s32.totalorder %s70, %s73
    %p82 = scmp.eq.s32.totalorder %s13, 1
    %p83 = por %p81, %p82
    %p84 = scmp.ne.s32.totalorder %s73, %s74
    %p85 = scmp.eq.s32.totalorder %s13, 0
    %p86 = por %p84, %p85
    %p87 = scmp.ne.s32.totalorder %s73, %s74
    %p88 = scmp.eq.s32.totalorder %s14, 1
    %p89 = por %p87, %p88
    %p91 = scmp.ne.s32.totalorder %s74, %s90
    %p92 = scmp.eq.s32.totalorder %s14, 0
    %p93 = por %p91, %p92
    %p94 = scmp.le.s32.totalorder 1, %s8
    %p95 = scmp.lt.s32.totalorder %s8, 3
    %p96 = pnand %p94, %p95
    %p97 = pneg %p96
    // Predicated region
    $region9: #{_broadcast_mul_impl.1} parent=5 // pred_check
      _
    $region10: #{_broadcast_mul_impl.1} parent=5 // pred_check_branch
      %99 = sbr.rel (%p96) target = $region12
    $region11: #{_broadcast_mul_impl.1} parent=5 // pred_region
      %s100 = ssub.s32 %s8, 1
    $region12: #{_broadcast_mul_impl.1} parent=5 // pred_fallthru
      _
    %p101 = scmp.lt.s32.totalorder %s8, 2
    // Predicated region
    $region13: #{_broadcast_mul_impl.1} parent=5 // pred_check
      %p102 = pneg %p101
    $region14: #{_broadcast_mul_impl.1} parent=5 // pred_check_branch
      %104 = sbr.rel (%p102) target = $region16
    $region15: #{_broadcast_mul_impl.1} parent=5 // pred_region
      // Predicated region
      $region17: #{_broadcast_mul_impl.1} parent=15 // pred_check
        %p105 = pneg %p28
      $region18: #{_broadcast_mul_impl.1} parent=15 // pred_check_branch
        %107 = sbr.rel (%p105) target = $region20
      $region19: #{_broadcast_mul_impl.1} parent=15 // pred_region
        %p108 = scmp.lt.s32.totalorder %s8, 1
        %s109 = scalar_select %p108, %s8, 1
        %s110 = smul.addr %s109, 4
        %s111 = scalar_lea.vmem %s0, %s110
      $region20: #{_broadcast_mul_impl.1} parent=15 // pred_fallthru
        _
      // Predicated region
      $region21: #{_broadcast_mul_impl.1} parent=15 // pred_check
        %p112 = pneg %p54
      $region22: #{_broadcast_mul_impl.1} parent=15 // pred_check_branch
        %114 = sbr.rel (%p112) target = $region24
      $region23: #{_broadcast_mul_impl.1} parent=15 // pred_region
        %s115 = smul.u32 54, %s8
        %p116 = scmp.lt.s32.totalorder %s115, 107
        %s117 = scalar_select %p116, %s115, 107
        %s118 = smul.addr %s117, 2
        %s119 = smul.addr %s118, 8
        %s120 = scalar_lea.vmem %s1, %s119
        %s121 = smul.u32 54, %s8
      $region24: #{_broadcast_mul_impl.1} parent=15 // pred_fallthru
        _
    $region16: #{_broadcast_mul_impl.1} parent=5 // pred_fallthru
      _
    %p122 = scmp.le.s32.totalorder 1, %s8
    %p123 = scmp.lt.s32.totalorder %s8, 3
    %p124 = pnand %p122, %p123
    %p125 = pneg %p124
    // Predicated region
    $region25: #{_broadcast_mul_impl.1} parent=5 // pred_check
      _
    $region26: #{_broadcast_mul_impl.1} parent=5 // pred_check_branch
      %127 = sbr.rel (%p124) target = $region28
    $region27: #{_broadcast_mul_impl.1} parent=5 // pred_region
      %s128 = ssub.s32 %s8, 1
      %p129 = scmp.lt.s32.totalorder %s13, 1
      %s130 = scalar_select %p129, %s13, 1
      %s131 = smul.addr %s130, 4
      %s132 = scalar_lea.vmem %s0, %s131
      %p133 = pneg %p34
      %p134 = pneg %p31
      %s135 = smul.u32 54, %s13
      %p136 = scmp.lt.s32.totalorder %s135, 107
      %s137 = scalar_select %p136, %s135, 107
      %s138 = smul.addr %s137, 2
      %s139 = smul.addr %s138, 8
      %s140 = scalar_lea.vmem %s1, %s139
      %p141 = pneg %p60
      %p142 = pneg %p57
      %p143 = pneg %p86
      %p144 = pneg %p83
      %s145 = smul.u32 54, %s13
      %p146 = scmp.lt.s32.totalorder %s145, 107
      %s147 = scalar_select %p146, %s145, 107
      %s148 = smul.addr %s147, 2
      %s149 = smul.addr %s148, 8
      %s150 = scalar_lea.vmem %s2, %s149
      %p151 = scmp.lt.s32.totalorder %s13, 1
      %s152 = scalar_select %p151, %s13, 1
      %s153 = smul.addr %s152, 4
      %s154 = scalar_lea.vmem %s0, %s153
      %s155 = smul.u32 54, %s13
      %p156 = scmp.lt.s32.totalorder %s155, 107
      %s157 = scalar_select %p156, %s155, 107
      %s158 = smul.addr %s157, 2
      %s159 = smul.addr %s158, 8
      %s160 = scalar_lea.vmem %s1, %s159
      %s161 = smul.u32 54, %s13
      %s162 = smul.u32 54, %s13
      %p163 = scmp.lt.s32.totalorder %s162, 107
      %s164 = scalar_select %p163, %s162, 107
      %s165 = smul.addr %s164, 2
      %s166 = smul.addr %s165, 8
      %s167 = scalar_lea.vmem %s2, %s166
      %s168 = smul.u32 54, %s13
      %v169 = vld [vmem:[%s154] sm:$0xf]
      %v171 = vlaneseq
      %v172 = vshrl.u32 %v171, 7
      %v173 = vsub.s32 0, %v172
      %v174 = vrot.slane %v169, %v173
      %v175 = vlaneseq
      %v176 = vshrl.u32 %v175, 7
      %v177 = vsub.s32 1, %v176
      %v178 = vrot.slane %v169, %v177
      %v179 = vlaneseq
      %v180 = vshrl.u32 %v179, 7
      %v181 = vsub.s32 2, %v180
      %v182 = vrot.slane %v169, %v181
      %v183 = vlaneseq
      %v184 = vshrl.u32 %v183, 7
      %v185 = vsub.s32 3, %v184
      %v186 = vrot.slane %v169, %v185
      %191 = vxpose.xlu0.b32.start [1/16] %v174, 128
      %192 = vxpose.xlu0.b32.cont [2/16] 0.0, 128
      %193 = vxpose.xlu0.b32.cont [3/16] 0.0, 128
      %194 = vxpose.xlu0.b32.cont [4/16] 0.0, 128
      %195 = vxpose.xlu0.b32.cont [5/16] 0.0, 128
      %196 = vxpose.xlu0.b32.cont [6/16] 0.0, 128
      %197 = vxpose.xlu0.b32.cont [7/16] 0.0, 128
      %198 = vxpose.xlu0.b32.cont [8/16] 0.0, 128
      %199 = vxpose.xlu0.b32.cont [9/16] 0.0, 128
      %200 = vxpose.xlu0.b32.cont [10/16] 0.0, 128
      %201 = vxpose.xlu0.b32.cont [11/16] 0.0, 128
      %202 = vxpose.xlu0.b32.cont [12/16] 0.0, 128
      %203 = vxpose.xlu0.b32.cont [13/16] 0.0, 128
      %204 = vxpose.xlu0.b32.cont [14/16] 0.0, 128
      %205 = vxpose.xlu0.b32.cont [15/16] 0.0, 128
      %206 = vxpose.xlu0.b32.end [16/16] 0.0, 128
      %v207 = vpop.trf.xlu0
      %v208 = vpop.trf.xlu0
      %v209 = vpop.trf.xlu0
      %v210 = vpop.trf.xlu0
      %v211 = vpop.trf.xlu0
      %v212 = vpop.trf.xlu0
      %v213 = vpop.trf.xlu0
      %v214 = vpop.trf.xlu0
      %v215 = vpop.trf.xlu0
      %v216 = vpop.trf.xlu0
      %v217 = vpop.trf.xlu0
      %v218 = vpop.trf.xlu0
      %v219 = vpop.trf.xlu0
      %v220 = vpop.trf.xlu0
      %v221 = vpop.trf.xlu0
      %v222 = vpop.trf.xlu0
      %223 = vxpose.xlu0.b32.start [1/16] %v178, 128
      %224 = vxpose.xlu0.b32.cont [2/16] 0.0, 128
      %225 = vxpose.xlu0.b32.cont [3/16] 0.0, 128
      %226 = vxpose.xlu0.b32.cont [4/16] 0.0, 128
      %227 = vxpose.xlu0.b32.cont [5/16] 0.0, 128
      %228 = vxpose.xlu0.b32.cont [6/16] 0.0, 128
      %229 = vxpose.xlu0.b32.cont [7/16] 0.0, 128
      %230 = vxpose.xlu0.b32.cont [8/16] 0.0, 128
      %231 = vxpose.xlu0.b32.cont [9/16] 0.0, 128
      %232 = vxpose.xlu0.b32.cont [10/16] 0.0, 128
      %233 = vxpose.xlu0.b32.cont [11/16] 0.0, 128
      %234 = vxpose.xlu0.b32.cont [12/16] 0.0, 128
      %235 = vxpose.xlu0.b32.cont [13/16] 0.0, 128
      %236 = vxpose.xlu0.b32.cont [14/16] 0.0, 128
      %237 = vxpose.xlu0.b32.cont [15/16] 0.0, 128
      %238 = vxpose.xlu0.b32.end [16/16] 0.0, 128
      %v239 = vpop.trf.xlu0
      %v240 = vpop.trf.xlu0
      %v241 = vpop.trf.xlu0
      %v242 = vpop.trf.xlu0
      %v243 = vpop.trf.xlu0
      %v244 = vpop.trf.xlu0
      %v245 = vpop.trf.xlu0
      %v246 = vpop.trf.xlu0
      %v247 = vpop.trf.xlu0
      %v248 = vpop.trf.xlu0
      %v249 = vpop.trf.xlu0
      %v250 = vpop.trf.xlu0
      %v251 = vpop.trf.xlu0
      %v252 = vpop.trf.xlu0
      %v253 = vpop.trf.xlu0
      %v254 = vpop.trf.xlu0
      %255 = vxpose.xlu0.b32.start [1/16] %v182, 128
      %256 = vxpose.xlu0.b32.cont [2/16] 0.0, 128
      %257 = vxpose.xlu0.b32.cont [3/16] 0.0, 128
      %258 = vxpose.xlu0.b32.cont [4/16] 0.0, 128
      %259 = vxpose.xlu0.b32.cont [5/16] 0.0, 128
      %260 = vxpose.xlu0.b32.cont [6/16] 0.0, 128
      %261 = vxpose.xlu0.b32.cont [7/16] 0.0, 128
      %262 = vxpose.xlu0.b32.cont [8/16] 0.0, 128
      %263 = vxpose.xlu0.b32.cont [9/16] 0.0, 128
      %264 = vxpose.xlu0.b32.cont [10/16] 0.0, 128
      %265 = vxpose.xlu0.b32.cont [11/16] 0.0, 128
      %266 = vxpose.xlu0.b32.cont [12/16] 0.0, 128
      %267 = vxpose.xlu0.b32.cont [13/16] 0.0, 128
      %268 = vxpose.xlu0.b32.cont [14/16] 0.0, 128
      %269 = vxpose.xlu0.b32.cont [15/16] 0.0, 128
      %270 = vxpose.xlu0.b32.end [16/16] 0.0, 128
      %v271 = vpop.trf.xlu0
      %v272 = vpop.trf.xlu0
      %v273 = vpop.trf.xlu0
      %v274 = vpop.trf.xlu0
      %v275 = vpop.trf.xlu0
      %v276 = vpop.trf.xlu0
      %v277 = vpop.trf.xlu0
      %v278 = vpop.trf.xlu0
      %v279 = vpop.trf.xlu0
      %v280 = vpop.trf.xlu0
      %v281 = vpop.trf.xlu0
      %v282 = vpop.trf.xlu0
      %v283 = vpop.trf.xlu0
      %v284 = vpop.trf.xlu0
      %v285 = vpop.trf.xlu0
      %v286 = vpop.trf.xlu0
      %287 = vxpose.xlu0.b32.start [1/16] %v186, 128
      %288 = vxpose.xlu0.b32.cont [2/16] 0.0, 128
      %289 = vxpose.xlu0.b32.cont [3/16] 0.0, 128
      %290 = vxpose.xlu0.b32.cont [4/16] 0.0, 128
      %291 = vxpose.xlu0.b32.cont [5/16] 0.0, 128
      %292 = vxpose.xlu0.b32.cont [6/16] 0.0, 128
      %293 = vxpose.xlu0.b32.cont [7/16] 0.0, 128
      %294 = vxpose.xlu0.b32.cont [8/16] 0.0, 128
      %295 = vxpose.xlu0.b32.cont [9/16] 0.0, 128
      %296 = vxpose.xlu0.b32.cont [10/16] 0.0, 128
      %297 = vxpose.xlu0.b32.cont [11/16] 0.0, 128
      %298 = vxpose.xlu0.b32.cont [12/16] 0.0, 128
      %299 = vxpose.xlu0.b32.cont [13/16] 0.0, 128
      %300 = vxpose.xlu0.b32.cont [14/16] 0.0, 128
      %301 = vxpose.xlu0.b32.cont [15/16] 0.0, 128
      %302 = vxpose.xlu0.b32.end [16/16] 0.0, 128
      %v303 = vpop.trf.xlu0
      %v304 = vpop.trf.xlu0
      %v305 = vpop.trf.xlu0
      %v306 = vpop.trf.xlu0
      %v307 = vpop.trf.xlu0
      %v308 = vpop.trf.xlu0
      %v309 = vpop.trf.xlu0
      %v310 = vpop.trf.xlu0
      %v311 = vpop.trf.xlu0
      %v312 = vpop.trf.xlu0
      %v313 = vpop.trf.xlu0
      %v314 = vpop.trf.xlu0
      %v315 = vpop.trf.xlu0
      %v316 = vpop.trf.xlu0
      %v317 = vpop.trf.xlu0
      %v318 = vpop.trf.xlu0
      %v319 = vld [vmem:[%s160] sm:$0xff]
      %v320 = vld [vmem:[%s160 + $0x8] sm:$0xff]
      %v321 = vld [vmem:[%s160 + $0x10] sm:$0xff]
      %v322 = vld [vmem:[%s160 + $0x18] sm:$0xff]
      %v323 = vld [vmem:[%s160 + $0x20] sm:$0xff]
      %v324 = vld [vmem:[%s160 + $0x28] sm:$0xff]
      %v325 = vld [vmem:[%s160 + $0x30] sm:$0xff]
      %v326 = vld [vmem:[%s160 + $0x38] sm:$0xff]
      %v327 = vld [vmem:[%s160 + $0x40] sm:$0xff]
      %v328 = vld [vmem:[%s160 + $0x48] sm:$0xff]
      %v329 = vld [vmem:[%s160 + $0x50] sm:$0xff]
      %v330 = vld [vmem:[%s160 + $0x58] sm:$0xff]
      %v331 = vld [vmem:[%s160 + $0x60] sm:$0xff]
      %v332 = vld [vmem:[%s160 + $0x68] sm:$0xff]
      %v333 = vld [vmem:[%s160 + $0x70] sm:$0xff]
      %v334 = vld [vmem:[%s160 + $0x78] sm:$0xff]
      %v335 = vld [vmem:[%s160 + $0x80] sm:$0xff]
      %v336 = vld [vmem:[%s160 + $0x88] sm:$0xff]
      %v337 = vld [vmem:[%s160 + $0x90] sm:$0xff]
      %v338 = vld [vmem:[%s160 + $0x98] sm:$0xff]
      %v339 = vld [vmem:[%s160 + $0xa0] sm:$0xff]
      %v340 = vld [vmem:[%s160 + $0xa8] sm:$0xff]
      %v341 = vld [vmem:[%s160 + $0xb0] sm:$0xff]
      %v342 = vld [vmem:[%s160 + $0xb8] sm:$0xff]
      %v343 = vld [vmem:[%s160 + $0xc0] sm:$0xff]
      %v344 = vld [vmem:[%s160 + $0xc8] sm:$0xff]
      %v345 = vld [vmem:[%s160 + $0xd0] sm:$0xff]
      %v346 = vld [vmem:[%s160 + $0xd8] sm:$0xff]
      %v347 = vld [vmem:[%s160 + $0xe0] sm:$0xff]
      %v348 = vld [vmem:[%s160 + $0xe8] sm:$0xff]
      %v349 = vld [vmem:[%s160 + $0xf0] sm:$0xff]
      %v350 = vld [vmem:[%s160 + $0xf8] sm:$0xff]
      %v351 = vld [vmem:[%s160 + $0x100] sm:$0xff]
      %v352 = vld [vmem:[%s160 + $0x108] sm:$0xff]
      %v353 = vld [vmem:[%s160 + $0x110] sm:$0xff]
      %v354 = vld [vmem:[%s160 + $0x118] sm:$0xff]
      %v355 = vld [vmem:[%s160 + $0x120] sm:$0xff]
      %v356 = vld [vmem:[%s160 + $0x128] sm:$0xff]
      %v357 = vld [vmem:[%s160 + $0x130] sm:$0xff]
      %v358 = vld [vmem:[%s160 + $0x138] sm:$0xff]
      %v359 = vld [vmem:[%s160 + $0x140] sm:$0xff]
      %v360 = vld [vmem:[%s160 + $0x148] sm:$0xff]
      %v361 = vld [vmem:[%s160 + $0x150] sm:$0xff]
      %v362 = vld [vmem:[%s160 + $0x158] sm:$0xff]
      %v363 = vld [vmem:[%s160 + $0x160] sm:$0xff]
      %v364 = vld [vmem:[%s160 + $0x168] sm:$0xff]
      %v365 = vld [vmem:[%s160 + $0x170] sm:$0xff]
      %v366 = vld [vmem:[%s160 + $0x178] sm:$0xff]
      %v367 = vld [vmem:[%s160 + $0x180] sm:$0xff]
      %v368 = vld [vmem:[%s160 + $0x188] sm:$0xff]
      %v369 = vld [vmem:[%s160 + $0x190] sm:$0xff]
      %v370 = vld [vmem:[%s160 + $0x198] sm:$0xff]
      %v371 = vld [vmem:[%s160 + $0x1a0] sm:$0xff]
      %v372 = vld [vmem:[%s160 + $0x1a8] sm:$0xff]
      %v373 = vld [vmem:[%s160 + $0x1b0] sm:$0xff]
      %v374 = vld [vmem:[%s160 + $0x1b8] sm:$0xff]
      %v375 = vld [vmem:[%s160 + $0x1c0] sm:$0xff]
      %v376 = vld [vmem:[%s160 + $0x1c8] sm:$0xff]
      %v377 = vld [vmem:[%s160 + $0x1d0] sm:$0xff]
      %v378 = vld [vmem:[%s160 + $0x1d8] sm:$0xff]
      %v379 = vld [vmem:[%s160 + $0x1e0] sm:$0xff]
      %v380 = vld [vmem:[%s160 + $0x1e8] sm:$0xff]
      %v381 = vld [vmem:[%s160 + $0x1f0] sm:$0xff]
      %v382 = vld [vmem:[%s160 + $0x1f8] sm:$0xff]
      %v383 = vld [vmem:[%s160 + $0x200] sm:$0xff]
      %v384 = vld [vmem:[%s160 + $0x208] sm:$0xff]
      %v385 = vld [vmem:[%s160 + $0x210] sm:$0xff]
      %v386 = vld [vmem:[%s160 + $0x218] sm:$0xff]
      %v387 = vld [vmem:[%s160 + $0x220] sm:$0xff]
      %v388 = vld [vmem:[%s160 + $0x228] sm:$0xff]
      %v389 = vld [vmem:[%s160 + $0x230] sm:$0xff]
      %v390 = vld [vmem:[%s160 + $0x238] sm:$0xff]
      %v391 = vld [vmem:[%s160 + $0x240] sm:$0xff]
      %v392 = vld [vmem:[%s160 + $0x248] sm:$0xff]
      %v393 = vld [vmem:[%s160 + $0x250] sm:$0xff]
      %v394 = vld [vmem:[%s160 + $0x258] sm:$0xff]
      %v395 = vld [vmem:[%s160 + $0x260] sm:$0xff]
      %v396 = vld [vmem:[%s160 + $0x268] sm:$0xff]
      %v397 = vld [vmem:[%s160 + $0x270] sm:$0xff]
      %v398 = vld [vmem:[%s160 + $0x278] sm:$0xff]
      %v399 = vld [vmem:[%s160 + $0x280] sm:$0xff]
      %v400 = vld [vmem:[%s160 + $0x288] sm:$0xff]
      %v401 = vld [vmem:[%s160 + $0x290] sm:$0xff]
      %v402 = vld [vmem:[%s160 + $0x298] sm:$0xff]
      %v403 = vld [vmem:[%s160 + $0x2a0] sm:$0xff]
      %v404 = vld [vmem:[%s160 + $0x2a8] sm:$0xff]
      %v405 = vld [vmem:[%s160 + $0x2b0] sm:$0xff]
      %v406 = vld [vmem:[%s160 + $0x2b8] sm:$0xff]
      %v407 = vld [vmem:[%s160 + $0x2c0] sm:$0xff]
      %v408 = vld [vmem:[%s160 + $0x2c8] sm:$0xff]
      %v409 = vld [vmem:[%s160 + $0x2d0] sm:$0xff]
      %v410 = vld [vmem:[%s160 + $0x2d8] sm:$0xff]
      %v411 = vld [vmem:[%s160 + $0x2e0] sm:$0xff]
      %v412 = vld [vmem:[%s160 + $0x2e8] sm:$0xff]
      %v413 = vld [vmem:[%s160 + $0x2f0] sm:$0xff]
      %v414 = vld [vmem:[%s160 + $0x2f8] sm:$0xff]
      %v415 = vld [vmem:[%s160 + $0x300] sm:$0xff]
      %v416 = vld [vmem:[%s160 + $0x308] sm:$0xff]
      %v417 = vld [vmem:[%s160 + $0x310] sm:$0xff]
      %v418 = vld [vmem:[%s160 + $0x318] sm:$0xff]
      %v419 = vld [vmem:[%s160 + $0x320] sm:$0xff]
      %v420 = vld [vmem:[%s160 + $0x328] sm:$0xff]
      %v421 = vld [vmem:[%s160 + $0x330] sm:$0xff]
      %v422 = vld [vmem:[%s160 + $0x338] sm:$0xff]
      %v423 = vld [vmem:[%s160 + $0x340] sm:$0xff]
      %v424 = vld [vmem:[%s160 + $0x348] sm:$0xff]
      %v425 = vld [vmem:[%s160 + $0x350] sm:$0xff]
      %v426 = vld [vmem:[%s160 + $0x358] sm:$0xff]
      %428 = vset.pattern.permute.xlu0 0
      %429 = vperm.xlu0 %428, %v207
      %v430 = vpop.permute.xlu0 %429
      %433 = vset.pattern.permute.xlu0 0
      %434 = vperm.xlu0 %433, %v208
      %v435 = vpop.permute.xlu0 %434
      %438 = vset.pattern.permute.xlu0 0
      %439 = vperm.xlu0 %438, %v209
      %v440 = vpop.permute.xlu0 %439
      %443 = vset.pattern.permute.xlu0 0
      %444 = vperm.xlu0 %443, %v210
      %v445 = vpop.permute.xlu0 %444
      %448 = vset.pattern.permute.xlu0 0
      %449 = vperm.xlu0 %448, %v211
      %v450 = vpop.permute.xlu0 %449
      %453 = vset.pattern.permute.xlu0 0
      %454 = vperm.xlu0 %453, %v212
      %v455 = vpop.permute.xlu0 %454
      %458 = vset.pattern.permute.xlu0 0
      %459 = vperm.xlu0 %458, %v213
      %v460 = vpop.permute.xlu0 %459
      %463 = vset.pattern.permute.xlu0 0
      %464 = vperm.xlu0 %463, %v214
      %v465 = vpop.permute.xlu0 %464
      %468 = vset.pattern.permute.xlu0 0
      %469 = vperm.xlu0 %468, %v215
      %v470 = vpop.permute.xlu0 %469
      %473 = vset.pattern.permute.xlu0 0
      %474 = vperm.xlu0 %473, %v216
      %v475 = vpop.permute.xlu0 %474
      %478 = vset.pattern.permute.xlu0 0
      %479 = vperm.xlu0 %478, %v217
      %v480 = vpop.permute.xlu0 %479
      %483 = vset.pattern.permute.xlu0 0
      %484 = vperm.xlu0 %483, %v218
      %v485 = vpop.permute.xlu0 %484
      %488 = vset.pattern.permute.xlu0 0
      %489 = vperm.xlu0 %488, %v219
      %v490 = vpop.permute.xlu0 %489
      %493 = vset.pattern.permute.xlu0 0
      %494 = vperm.xlu0 %493, %v220
      %v495 = vpop.permute.xlu0 %494
      %498 = vset.pattern.permute.xlu0 0
      %499 = vperm.xlu0 %498, %v221
      %v500 = vpop.permute.xlu0 %499
      %503 = vset.pattern.permute.xlu0 0
      %504 = vperm.xlu0 %503, %v222
      %v505 = vpop.permute.xlu0 %504
      %508 = vset.pattern.permute.xlu0 0
      %509 = vperm.xlu0 %508, %v239
      %v510 = vpop.permute.xlu0 %509
      %513 = vset.pattern.permute.xlu0 0
      %514 = vperm.xlu0 %513, %v240
      %v515 = vpop.permute.xlu0 %514
      %518 = vset.pattern.permute.xlu0 0
      %519 = vperm.xlu0 %518, %v241
      %v520 = vpop.permute.xlu0 %519
      %523 = vset.pattern.permute.xlu0 0
      %524 = vperm.xlu0 %523, %v242
      %v525 = vpop.permute.xlu0 %524
      %528 = vset.pattern.permute.xlu0 0
      %529 = vperm.xlu0 %528, %v243
      %v530 = vpop.permute.xlu0 %529
      %533 = vset.pattern.permute.xlu0 0
      %534 = vperm.xlu0 %533, %v244
      %v535 = vpop.permute.xlu0 %534
      %538 = vset.pattern.permute.xlu0 0
      %539 = vperm.xlu0 %538, %v245
      %v540 = vpop.permute.xlu0 %539
      %543 = vset.pattern.permute.xlu0 0
      %544 = vperm.xlu0 %543, %v246
      %v545 = vpop.permute.xlu0 %544
      %548 = vset.pattern.permute.xlu0 0
      %549 = vperm.xlu0 %548, %v247
      %v550 = vpop.permute.xlu0 %549
      %553 = vset.pattern.permute.xlu0 0
      %554 = vperm.xlu0 %553, %v248
      %v555 = vpop.permute.xlu0 %554
      %558 = vset.pattern.permute.xlu0 0
      %559 = vperm.xlu0 %558, %v249
      %v560 = vpop.permute.xlu0 %559
      %563 = vset.pattern.permute.xlu0 0
      %564 = vperm.xlu0 %563, %v250
      %v565 = vpop.permute.xlu0 %564
      %568 = vset.pattern.permute.xlu0 0
      %569 = vperm.xlu0 %568, %v251
      %v570 = vpop.permute.xlu0 %569
      %573 = vset.pattern.permute.xlu0 0
      %574 = vperm.xlu0 %573, %v252
      %v575 = vpop.permute.xlu0 %574
      %578 = vset.pattern.permute.xlu0 0
      %579 = vperm.xlu0 %578, %v253
      %v580 = vpop.permute.xlu0 %579
      %583 = vset.pattern.permute.xlu0 0
      %584 = vperm.xlu0 %583, %v254
      %v585 = vpop.permute.xlu0 %584
      %588 = vset.pattern.permute.xlu0 0
      %589 = vperm.xlu0 %588, %v271
      %v590 = vpop.permute.xlu0 %589
      %593 = vset.pattern.permute.xlu0 0
      %594 = vperm.xlu0 %593, %v272
      %v595 = vpop.permute.xlu0 %594
      %598 = vset.pattern.permute.xlu0 0
      %599 = vperm.xlu0 %598, %v273
      %v600 = vpop.permute.xlu0 %599
      %603 = vset.pattern.permute.xlu0 0
      %604 = vperm.xlu0 %603, %v274
      %v605 = vpop.permute.xlu0 %604
      %608 = vset.pattern.permute.xlu0 0
      %609 = vperm.xlu0 %608, %v275
      %v610 = vpop.permute.xlu0 %609
      %613 = vset.pattern.permute.xlu0 0
      %614 = vperm.xlu0 %613, %v276
      %v615 = vpop.permute.xlu0 %614
      %618 = vset.pattern.permute.xlu0 0
      %619 = vperm.xlu0 %618, %v277
      %v620 = vpop.permute.xlu0 %619
      %623 = vset.pattern.permute.xlu0 0
      %624 = vperm.xlu0 %623, %v278
      %v625 = vpop.permute.xlu0 %624
      %628 = vset.pattern.permute.xlu0 0
      %629 = vperm.xlu0 %628, %v279
      %v630 = vpop.permute.xlu0 %629
      %633 = vset.pattern.permute.xlu0 0
      %634 = vperm.xlu0 %633, %v280
      %v635 = vpop.permute.xlu0 %634
      %638 = vset.pattern.permute.xlu0 0
      %639 = vperm.xlu0 %638, %v281
      %v640 = vpop.permute.xlu0 %639
      %643 = vset.pattern.permute.xlu0 0
      %644 = vperm.xlu0 %643, %v282
      %v645 = vpop.permute.xlu0 %644
      %648 = vset.pattern.permute.xlu0 0
      %649 = vperm.xlu0 %648, %v283
      %v650 = vpop.permute.xlu0 %649
      %653 = vset.pattern.permute.xlu0 0
      %654 = vperm.xlu0 %653, %v284
      %v655 = vpop.permute.xlu0 %654
      %658 = vset.pattern.permute.xlu0 0
      %659 = vperm.xlu0 %658, %v285
      %v660 = vpop.permute.xlu0 %659
      %663 = vset.pattern.permute.xlu0 0
      %664 = vperm.xlu0 %663, %v286
      %v665 = vpop.permute.xlu0 %664
      %668 = vset.pattern.permute.xlu0 0
      %669 = vperm.xlu0 %668, %v303
      %v670 = vpop.permute.xlu0 %669
      %673 = vset.pattern.permute.xlu0 0
      %674 = vperm.xlu0 %673, %v304
      %v675 = vpop.permute.xlu0 %674
      %678 = vset.pattern.permute.xlu0 0
      %679 = vperm.xlu0 %678, %v305
      %v680 = vpop.permute.xlu0 %679
      %683 = vset.pattern.permute.xlu0 0
      %684 = vperm.xlu0 %683, %v306
      %v685 = vpop.permute.xlu0 %684
      %688 = vset.pattern.permute.xlu0 0
      %689 = vperm.xlu0 %688, %v307
      %v690 = vpop.permute.xlu0 %689
      %693 = vset.pattern.permute.xlu0 0
      %694 = vperm.xlu0 %693, %v308
      %v695 = vpop.permute.xlu0 %694
      %v697 = vmul.f32 %v319, %v430
      %v698 = vmul.f32 %v320, %v430
      %v699 = vmul.f32 %v321, %v435
      %v700 = vmul.f32 %v322, %v435
      %v701 = vmul.f32 %v323, %v440
      %v702 = vmul.f32 %v324, %v440
      %v703 = vmul.f32 %v325, %v445
      %v704 = vmul.f32 %v326, %v445
      %v705 = vmul.f32 %v327, %v450
      %v706 = vmul.f32 %v328, %v450
      %v707 = vmul.f32 %v329, %v455
      %v708 = vmul.f32 %v330, %v455
      %v709 = vmul.f32 %v331, %v460
      %v710 = vmul.f32 %v332, %v460
      %v711 = vmul.f32 %v333, %v465
      %v712 = vmul.f32 %v334, %v465
      %v713 = vmul.f32 %v335, %v470
      %v714 = vmul.f32 %v336, %v470
      %v715 = vmul.f32 %v337, %v475
      %v716 = vmul.f32 %v338, %v475
      %v717 = vmul.f32 %v339, %v480
      %v718 = vmul.f32 %v340, %v480
      %v719 = vmul.f32 %v341, %v485
      %v720 = vmul.f32 %v342, %v485
      %v721 = vmul.f32 %v343, %v490
      %v722 = vmul.f32 %v344, %v490
      %v723 = vmul.f32 %v345, %v495
      %v724 = vmul.f32 %v346, %v495
      %v725 = vmul.f32 %v347, %v500
      %v726 = vmul.f32 %v348, %v500
      %v727 = vmul.f32 %v349, %v505
      %v728 = vmul.f32 %v350, %v505
      %v729 = vmul.f32 %v351, %v510
      %v730 = vmul.f32 %v352, %v510
      %v731 = vmul.f32 %v353, %v515
      %v732 = vmul.f32 %v354, %v515
      %v733 = vmul.f32 %v355, %v520
      %v734 = vmul.f32 %v356, %v520
      %v735 = vmul.f32 %v357, %v525
      %v736 = vmul.f32 %v358, %v525
      %v737 = vmul.f32 %v359, %v530
      %v738 = vmul.f32 %v360, %v530
      %v739 = vmul.f32 %v361, %v535
      %v740 = vmul.f32 %v362, %v535
      %v741 = vmul.f32 %v363, %v540
      %v742 = vmul.f32 %v364, %v540
      %v743 = vmul.f32 %v365, %v545
      %v744 = vmul.f32 %v366, %v545
      %v745 = vmul.f32 %v367, %v550
      %v746 = vmul.f32 %v368, %v550
      %v747 = vmul.f32 %v369, %v555
      %v748 = vmul.f32 %v370, %v555
      %v749 = vmul.f32 %v371, %v560
      %v750 = vmul.f32 %v372, %v560
      %v751 = vmul.f32 %v373, %v565
      %v752 = vmul.f32 %v374, %v565
      %v753 = vmul.f32 %v375, %v570
      %v754 = vmul.f32 %v376, %v570
      %v755 = vmul.f32 %v377, %v575
      %v756 = vmul.f32 %v378, %v575
      %v757 = vmul.f32 %v379, %v580
      %v758 = vmul.f32 %v380, %v580
      %v759 = vmul.f32 %v381, %v585
      %v760 = vmul.f32 %v382, %v585
      %v761 = vmul.f32 %v383, %v590
      %v762 = vmul.f32 %v384, %v590
      %v763 = vmul.f32 %v385, %v595
      %v764 = vmul.f32 %v386, %v595
      %v765 = vmul.f32 %v387, %v600
      %v766 = vmul.f32 %v388, %v600
      %v767 = vmul.f32 %v389, %v605
      %v768 = vmul.f32 %v390, %v605
      %v769 = vmul.f32 %v391, %v610
      %v770 = vmul.f32 %v392, %v610
      %v771 = vmul.f32 %v393, %v615
      %v772 = vmul.f32 %v394, %v615
      %v773 = vmul.f32 %v395, %v620
      %v774 = vmul.f32 %v396, %v620
      %v775 = vmul.f32 %v397, %v625
      %v776 = vmul.f32 %v398, %v625
      %v777 = vmul.f32 %v399, %v630
      %v778 = vmul.f32 %v400, %v630
      %v779 = vmul.f32 %v401, %v635
      %v780 = vmul.f32 %v402, %v635
      %v781 = vmul.f32 %v403, %v640
      %v782 = vmul.f32 %v404, %v640
      %v783 = vmul.f32 %v405, %v645
      %v784 = vmul.f32 %v406, %v645
      %v785 = vmul.f32 %v407, %v650
      %v786 = vmul.f32 %v408, %v650
      %v787 = vmul.f32 %v409, %v655
      %v788 = vmul.f32 %v410, %v655
      %v789 = vmul.f32 %v411, %v660
      %v790 = vmul.f32 %v412, %v660
      %v791 = vmul.f32 %v413, %v665
      %v792 = vmul.f32 %v414, %v665
      %v793 = vmul.f32 %v415, %v670
      %v794 = vmul.f32 %v416, %v670
      %v795 = vmul.f32 %v417, %v675
      %v796 = vmul.f32 %v418, %v675
      %v797 = vmul.f32 %v419, %v680
      %v798 = vmul.f32 %v420, %v680
      %v799 = vmul.f32 %v421, %v685
      %v800 = vmul.f32 %v422, %v685
      %v801 = vmul.f32 %v423, %v690
      %v802 = vmul.f32 %v424, %v690
      %v803 = vmul.f32 %v425, %v695
      %v804 = vmul.f32 %v426, %v695
      %805 = vst [vmem:[%s167] sm:$0xff] %v697
      %vm806 = vcmask 556032
      %807 = vst.msk [vmem:[%s167 + $0x8] sm:$0xff] %vm806, %v698
      %808 = vst [vmem:[%s167 + $0x10] sm:$0xff] %v699
      %809 = vst.msk [vmem:[%s167 + $0x18] sm:$0xff] %vm806, %v700
      %810 = vst [vmem:[%s167 + $0x20] sm:$0xff] %v701
      %811 = vst.msk [vmem:[%s167 + $0x28] sm:$0xff] %vm806, %v702
      %812 = vst [vmem:[%s167 + $0x30] sm:$0xff] %v703
      %813 = vst.msk [vmem:[%s167 + $0x38] sm:$0xff] %vm806, %v704
      %814 = vst [vmem:[%s167 + $0x40] sm:$0xff] %v705
      %815 = vst.msk [vmem:[%s167 + $0x48] sm:$0xff] %vm806, %v706
      %816 = vst [vmem:[%s167 + $0x50] sm:$0xff] %v707
      %817 = vst.msk [vmem:[%s167 + $0x58] sm:$0xff] %vm806, %v708
      %818 = vst [vmem:[%s167 + $0x60] sm:$0xff] %v709
      %819 = vst.msk [vmem:[%s167 + $0x68] sm:$0xff] %vm806, %v710
      %820 = vst [vmem:[%s167 + $0x70] sm:$0xff] %v711
      %821 = vst.msk [vmem:[%s167 + $0x78] sm:$0xff] %vm806, %v712
      %822 = vst [vmem:[%s167 + $0x80] sm:$0xff] %v713
      %823 = vst.msk [vmem:[%s167 + $0x88] sm:$0xff] %vm806, %v714
      %824 = vst [vmem:[%s167 + $0x90] sm:$0xff] %v715
      %825 = vst.msk [vmem:[%s167 + $0x98] sm:$0xff] %vm806, %v716
      %826 = vst [vmem:[%s167 + $0xa0] sm:$0xff] %v717
      %827 = vst.msk [vmem:[%s167 + $0xa8] sm:$0xff] %vm806, %v718
      %828 = vst [vmem:[%s167 + $0xb0] sm:$0xff] %v719
      %829 = vst.msk [vmem:[%s167 + $0xb8] sm:$0xff] %vm806, %v720
      %830 = vst [vmem:[%s167 + $0xc0] sm:$0xff] %v721
      %831 = vst.msk [vmem:[%s167 + $0xc8] sm:$0xff] %vm806, %v722
      %832 = vst [vmem:[%s167 + $0xd0] sm:$0xff] %v723
      %833 = vst.msk [vmem:[%s167 + $0xd8] sm:$0xff] %vm806, %v724
      %834 = vst [vmem:[%s167 + $0xe0] sm:$0xff] %v725
      %835 = vst.msk [vmem:[%s167 + $0xe8] sm:$0xff] %vm806, %v726
      %836 = vst [vmem:[%s167 + $0xf0] sm:$0xff] %v727
      %837 = vst.msk [vmem:[%s167 + $0xf8] sm:$0xff] %vm806, %v728
      %838 = vst [vmem:[%s167 + $0x100] sm:$0xff] %v729
      %839 = vst.msk [vmem:[%s167 + $0x108] sm:$0xff] %vm806, %v730
      %840 = vst [vmem:[%s167 + $0x110] sm:$0xff] %v731
      %841 = vst.msk [vmem:[%s167 + $0x118] sm:$0xff] %vm806, %v732
      %842 = vst [vmem:[%s167 + $0x120] sm:$0xff] %v733
      %843 = vst.msk [vmem:[%s167 + $0x128] sm:$0xff] %vm806, %v734
      %844 = vst [vmem:[%s167 + $0x130] sm:$0xff] %v735
      %845 = vst.msk [vmem:[%s167 + $0x138] sm:$0xff] %vm806, %v736
      %846 = vst [vmem:[%s167 + $0x140] sm:$0xff] %v737
      %847 = vst.msk [vmem:[%s167 + $0x148] sm:$0xff] %vm806, %v738
      %848 = vst [vmem:[%s167 + $0x150] sm:$0xff] %v739
      %849 = vst.msk [vmem:[%s167 + $0x158] sm:$0xff] %vm806, %v740
      %850 = vst [vmem:[%s167 + $0x160] sm:$0xff] %v741
      %851 = vst.msk [vmem:[%s167 + $0x168] sm:$0xff] %vm806, %v742
      %852 = vst [vmem:[%s167 + $0x170] sm:$0xff] %v743
      %853 = vst.msk [vmem:[%s167 + $0x178] sm:$0xff] %vm806, %v744
      %854 = vst [vmem:[%s167 + $0x180] sm:$0xff] %v745
      %855 = vst.msk [vmem:[%s167 + $0x188] sm:$0xff] %vm806, %v746
      %856 = vst [vmem:[%s167 + $0x190] sm:$0xff] %v747
      %857 = vst.msk [vmem:[%s167 + $0x198] sm:$0xff] %vm806, %v748
      %858 = vst [vmem:[%s167 + $0x1a0] sm:$0xff] %v749
      %859 = vst.msk [vmem:[%s167 + $0x1a8] sm:$0xff] %vm806, %v750
      %860 = vst [vmem:[%s167 + $0x1b0] sm:$0xff] %v751
      %861 = vst.msk [vmem:[%s167 + $0x1b8] sm:$0xff] %vm806, %v752
      %862 = vst [vmem:[%s167 + $0x1c0] sm:$0xff] %v753
      %863 = vst.msk [vmem:[%s167 + $0x1c8] sm:$0xff] %vm806, %v754
      %864 = vst [vmem:[%s167 + $0x1d0] sm:$0xff] %v755
      %865 = vst.msk [vmem:[%s167 + $0x1d8] sm:$0xff] %vm806, %v756
      %866 = vst [vmem:[%s167 + $0x1e0] sm:$0xff] %v757
      %867 = vst.msk [vmem:[%s167 + $0x1e8] sm:$0xff] %vm806, %v758
      %868 = vst [vmem:[%s167 + $0x1f0] sm:$0xff] %v759
      %869 = vst.msk [vmem:[%s167 + $0x1f8] sm:$0xff] %vm806, %v760
      %870 = vst [vmem:[%s167 + $0x200] sm:$0xff] %v761
      %871 = vst.msk [vmem:[%s167 + $0x208] sm:$0xff] %vm806, %v762
      %872 = vst [vmem:[%s167 + $0x210] sm:$0xff] %v763
      %873 = vst.msk [vmem:[%s167 + $0x218] sm:$0xff] %vm806, %v764
      %874 = vst [vmem:[%s167 + $0x220] sm:$0xff] %v765
      %875 = vst.msk [vmem:[%s167 + $0x228] sm:$0xff] %vm806, %v766
      %876 = vst [vmem:[%s167 + $0x230] sm:$0xff] %v767
      %877 = vst.msk [vmem:[%s167 + $0x238] sm:$0xff] %vm806, %v768
      %878 = vst [vmem:[%s167 + $0x240] sm:$0xff] %v769
      %879 = vst.msk [vmem:[%s167 + $0x248] sm:$0xff] %vm806, %v770
      %880 = vst [vmem:[%s167 + $0x250] sm:$0xff] %v771
      %881 = vst.msk [vmem:[%s167 + $0x258] sm:$0xff] %vm806, %v772
      %882 = vst [vmem:[%s167 + $0x260] sm:$0xff] %v773
      %883 = vst.msk [vmem:[%s167 + $0x268] sm:$0xff] %vm806, %v774
      %884 = vst [vmem:[%s167 + $0x270] sm:$0xff] %v775
      %885 = vst.msk [vmem:[%s167 + $0x278] sm:$0xff] %vm806, %v776
      %886 = vst [vmem:[%s167 + $0x280] sm:$0xff] %v777
      %887 = vst.msk [vmem:[%s167 + $0x288] sm:$0xff] %vm806, %v778
      %888 = vst [vmem:[%s167 + $0x290] sm:$0xff] %v779
      %889 = vst.msk [vmem:[%s167 + $0x298] sm:$0xff] %vm806, %v780
      %890 = vst [vmem:[%s167 + $0x2a0] sm:$0xff] %v781
      %891 = vst.msk [vmem:[%s167 + $0x2a8] sm:$0xff] %vm806, %v782
      %892 = vst [vmem:[%s167 + $0x2b0] sm:$0xff] %v783
      %893 = vst.msk [vmem:[%s167 + $0x2b8] sm:$0xff] %vm806, %v784
      %894 = vst [vmem:[%s167 + $0x2c0] sm:$0xff] %v785
      %895 = vst.msk [vmem:[%s167 + $0x2c8] sm:$0xff] %vm806, %v786
      %896 = vst [vmem:[%s167 + $0x2d0] sm:$0xff] %v787
      %897 = vst.msk [vmem:[%s167 + $0x2d8] sm:$0xff] %vm806, %v788
      %898 = vst [vmem:[%s167 + $0x2e0] sm:$0xff] %v789
      %899 = vst.msk [vmem:[%s167 + $0x2e8] sm:$0xff] %vm806, %v790
      %900 = vst [vmem:[%s167 + $0x2f0] sm:$0xff] %v791
      %901 = vst.msk [vmem:[%s167 + $0x2f8] sm:$0xff] %vm806, %v792
      %902 = vst [vmem:[%s167 + $0x300] sm:$0xff] %v793
      %903 = vst.msk [vmem:[%s167 + $0x308] sm:$0xff] %vm806, %v794
      %904 = vst [vmem:[%s167 + $0x310] sm:$0xff] %v795
      %905 = vst.msk [vmem:[%s167 + $0x318] sm:$0xff] %vm806, %v796
      %906 = vst [vmem:[%s167 + $0x320] sm:$0xff] %v797
      %907 = vst.msk [vmem:[%s167 + $0x328] sm:$0xff] %vm806, %v798
      %908 = vst [vmem:[%s167 + $0x330] sm:$0xff] %v799
      %909 = vst.msk [vmem:[%s167 + $0x338] sm:$0xff] %vm806, %v800
      %910 = vst [vmem:[%s167 + $0x340] sm:$0xff] %v801
      %911 = vst.msk [vmem:[%s167 + $0x348] sm:$0xff] %vm806, %v802
      %912 = vst [vmem:[%s167 + $0x350] sm:$0xff] %v803
      %913 = vst.msk [vmem:[%s167 + $0x358] sm:$0xff] %vm806, %v804
      %s914 = smul.u32 54, %s13
      %p915 = scmp.lt.s32.totalorder %s914, 107
      %s916 = scalar_select %p915, %s914, 107
      %s917 = smul.addr %s916, 2
      %s918 = smul.addr %s917, 8
      %s919 = scalar_lea.vmem %s2, %s918
      // Predicated region
      $region29: #{_broadcast_mul_impl.1} parent=27 // pred_check
        %p920 = pneg %p83
      $region30: #{_broadcast_mul_impl.1} parent=27 // pred_check_branch
        %922 = sbr.rel (%p920) target = $region32
      $region31: #{_broadcast_mul_impl.1} parent=27 // pred_region
        %s923 = smul.u32 54, %s13
      $region32: #{_broadcast_mul_impl.1} parent=27 // pred_fallthru
        _
    $region28: #{_broadcast_mul_impl.1} parent=5 // pred_fallthru
      _
    %p924 = scmp.le.s32.totalorder 2, %s8
    // Predicated region
    $region33: #{_broadcast_mul_impl.1} parent=5 // pred_check
      %p925 = pneg %p924
    $region34: #{_broadcast_mul_impl.1} parent=5 // pred_check_branch
      %927 = sbr.rel (%p925) target = $region36
    $region35: #{_broadcast_mul_impl.1} parent=5 // pred_region
      %s928 = ssub.s32 %s8, 2
      // Predicated region
      $region37: #{_broadcast_mul_impl.1} parent=35 // pred_check
        %p929 = pneg %p89
      $region38: #{_broadcast_mul_impl.1} parent=35 // pred_check_branch
        %931 = sbr.rel (%p929) target = $region40
      $region39: #{_broadcast_mul_impl.1} parent=35 // pred_region
        %s932 = smul.u32 54, %s14
        %p933 = scmp.lt.s32.totalorder %s932, 107
        %s934 = scalar_select %p933, %s932, 107
        %s935 = smul.addr %s934, 2
        %s936 = smul.addr %s935, 8
        %s937 = scalar_lea.vmem %s2, %s936
      $region40: #{_broadcast_mul_impl.1} parent=35 // pred_fallthru
        _
    $region36: #{_broadcast_mul_impl.1} parent=5 // pred_fallthru
      _
  $region6: #{_broadcast_mul_impl.1} parent=0 // loop_footer
    %s12 = sadd.s32 1, %s8
  $region7: #{_broadcast_mul_impl.1} parent=0 // loop_footer_branch
    %7 = sbr.rel target = $region3
  $region8: #{_broadcast_mul_impl.1} parent=0 // loop_exit
    _

</llo_original>
